<compile_context>
chip_gen: v5e
topology: v5e:2x2
jax: 0.10.0
libtpu: 0.0.40
codegen_flags: <defaults>
</compile_context>

<pallas_src>
import jax
import jax.numpy as jnp
from jax.experimental import pallas as pl
from jax.experimental.pallas import tpu as pltpu


def _round_up(v, m):
    return (v + m - 1) // m * m


def fm_kernel(w0_ref, x_ref, vw_ref, v2s_ref, y_ref, p_acc, q_acc):
    # w0_ref:  (1, 1) scalar in SMEM
    # x_ref:   (TILE_B, TILE_N) input tile (VMEM, auto-pipelined)
    # vw_ref:  (TILE_N, k+1) = [V | w]
    # v2s_ref: (TILE_N, 1)   = sum_k V^2 (pre-reduced in the wrapper)
    # y_ref:   (TILE_B, 1) output tile (resident across the n grid axis)
    # p_acc:   (TILE_B, k+1) f32 accumulator (VMEM scratch)
    # q_acc:   (TILE_B, 1)   f32 accumulator (VMEM scratch)
    j = pl.program_id(1)

    @pl.when(j == 0)
    def _init():
        p_acc[...] = jnp.zeros_like(p_acc)
        q_acc[...] = jnp.zeros_like(q_acc)

    x = x_ref[...]
    p_acc[...] += jnp.dot(x, vw_ref[...], preferred_element_type=jnp.float32)
    q_acc[...] += jnp.dot(x * x, v2s_ref[...], preferred_element_type=jnp.float32)

    @pl.when(j == pl.num_programs(1) - 1)
    def _finalize():
        p = p_acc[...]
        k = p.shape[1] - 1                       # static
        linear = w0_ref[0, 0] + p[:, k:]         # (TILE_B, 1)  fused x @ w
        pk = p[:, :k]
        interaction = 0.5 * (jnp.sum(pk * pk, axis=1, keepdims=True) - q_acc[...])
        y_ref[...] = (linear + interaction).astype(y_ref.dtype)


def factorization_machine(x, w0, w, V, *, tile_b=None, tile_n=None,
                          vmem_budget_bytes=24 * 1024 * 1024):
    """FM forward.  x: (B, n); w0: (1,) or scalar; w: (n,); V: (n, k).
    Returns y: (B,) float32."""
    B, n = x.shape
    k = V.shape[1]
    dt = x.dtype
    itemsize = jnp.dtype(dt).itemsize

    # One-time parameter fusion (hoisted out of the per-tile loop).
    Vf = V.astype(jnp.float32)
    vw = jnp.concatenate([V, jnp.reshape(w, (n, 1))], axis=1).astype(dt)   # (n, k+1)
    v2s = jnp.sum(Vf * Vf, axis=1, keepdims=True).astype(dt)                # (n, 1)
    w0_2d = jnp.reshape(w0, (1, 1)).astype(jnp.float32)

    # ---- tile-size selection --------------------------------------------
    if tile_b is None:
        # Target a few-MiB x tile so per-step overhead amortizes even for small n.
        target_x_bytes = 8 * 1024 * 1024
        tb = max(512, target_x_bytes // max(1, n * itemsize))
        tile_b = min(_round_up(B, 8), _round_up(min(tb, 4096), 8))
    tile_b = max(8, _round_up(min(int(tile_b), _round_up(B, 8)), 8))

    if tile_n is None:
        # Largest n-tile whose double-buffered working set fits the VMEM budget.
        per_n = 2 * tile_b * itemsize + 2 * (k + 2) * itemsize
        fixed = 2 * tile_b * 4 + tile_b * (k + 2) * 4      # out bufs + scratch
        cap = max(128, (vmem_budget_bytes - fixed) // per_n)
        tile_n = n if n <= cap else max(128, (cap // 128) * 128)
    elif tile_n >= n:
        tile_n = n                                 # single full-width n block
    else:
        tile_n = _round_up(int(tile_n), 128)       # lane alignment for partial blocks

    b_pad = _round_up(B, tile_b)
    n_pad = _round_up(n, tile_n)

    if b_pad != B or n_pad != n:
        x = jnp.pad(x, ((0, b_pad - B), (0, n_pad - n)))
    if n_pad != n:
        vw = jnp.pad(vw, ((0, n_pad - n), (0, 0)))
        v2s = jnp.pad(v2s, ((0, n_pad - n), (0, 0)))

    grid = (b_pad // tile_b, n_pad // tile_n)
    cost = pl.CostEstimate(
        flops=2 * b_pad * n_pad * (k + 2) + 4 * b_pad * n_pad,
        transcendentals=0,
        bytes_accessed=(b_pad * n_pad * itemsize
                        + grid[0] * n_pad * (k + 2) * itemsize
                        + b_pad * 4),
    )

    y2d = pl.pallas_call(
        fm_kernel,
        out_shape=jax.ShapeDtypeStruct((b_pad, 1), jnp.float32),
        grid_spec=pltpu.PrefetchScalarGridSpec(
            num_scalar_prefetch=0,
            grid=grid,
            in_specs=[
                pl.BlockSpec(memory_space=pltpu.MemorySpace.SMEM),        # w0
                pl.BlockSpec((tile_b, tile_n), lambda i, j: (i, j)),      # x
                pl.BlockSpec((tile_n, k + 1), lambda i, j: (j, 0)),       # [V | w]
                pl.BlockSpec((tile_n, 1), lambda i, j: (j, 0)),           # sum_k V^2
            ],
            out_specs=pl.BlockSpec((tile_b, 1), lambda i, j: (i, 0)),
            scratch_shapes=[
                pltpu.VMEM((tile_b, k + 1), jnp.float32),
                pltpu.VMEM((tile_b, 1), jnp.float32),
            ],
        ),
        compiler_params=pltpu.CompilerParams(
            dimension_semantics=("parallel", "arbitrary"),
            vmem_limit_bytes=48 * 1024 * 1024,
        ),
        cost_estimate=cost,
    )(w0_2d, x, vw, v2s)
    return y2d[:B, 0]


def _xavier_uniform(key, shape):
    fan_in, fan_out = shape
    bound = jnp.sqrt(6.0 / (fan_in + fan_out))
    return jax.random.uniform(key, shape, jnp.float32, -bound, bound)


if __name__ == "__main__":
    key = jax.random.PRNGKey(0)
    kx, kw, kv = jax.random.split(key, 3)

    # Small demo shapes: batch=250 (exercises batch-tile padding), n=192
    # features (exercises the n-reduction grid with tile_n=128), k=16 factors.
    B, n, k = 250, 192, 16

    x = jax.random.normal(kx, (B, n), dtype=jnp.float32)

    # PyTorch module inits w0/w to zeros and V with xavier_uniform; use a
    # small random w here so the fused linear path is actually validated.
    w0 = jnp.zeros((1,), dtype=jnp.float32)
    w = 0.01 * jax.random.normal(kw, (n,), dtype=jnp.float32)
    V = _xavier_uniform(kv, (n, k))

    # Pure-JAX reference (mirrors the PyTorch forward).
    linear_ref = w0[0] + x @ w
    vx2 = (x @ V) ** 2
    v2x2 = (x ** 2) @ (V ** 2)
    y_ref = linear_ref + jnp.sum(vx2 - v2x2, axis=1) / 2.0

    # 1) Explicit small tiles: exercises the multi-step n-reduction + epilogue.
    y = factorization_machine(x, w0, w, V, tile_b=64, tile_n=128)
    y = jax.block_until_ready(y)
    assert y.shape == (B,)
    assert jnp.allclose(y, y_ref, atol=5e-3, rtol=5e-3), float(
        jnp.max(jnp.abs(y - y_ref)))

    # 2) Default (auto-selected) tiles: single full-width n block path.
    y2 = jax.block_until_ready(factorization_machine(x, w0, w, V))
    assert jnp.allclose(y2, y_ref, atol=5e-3, rtol=5e-3), float(
        jnp.max(jnp.abs(y2 - y_ref)))

    print("KERNEL_OK")
</pallas_src>

<mosaic_0001>
module attributes {stable_mosaic.version = 11 : i64} {
  func.func @fm_kernel(%arg0: i32, %arg1: i32, %arg2: memref<1x1xf32, #tpu.memory_space<smem>>, %arg3: memref<64x128xf32, #tpu.memory_space<vmem>>, %arg4: memref<128x17xf32, #tpu.memory_space<vmem>>, %arg5: memref<128x1xf32, #tpu.memory_space<vmem>>, %arg6: memref<64x1xf32, #tpu.memory_space<vmem>>, %arg7: memref<64x17xf32, #tpu.memory_space<vmem>>, %arg8: memref<64x1xf32, #tpu.memory_space<vmem>>) attributes {dimension_semantics = [#tpu.dimension_semantics<parallel>, #tpu.dimension_semantics<arbitrary>], iteration_bounds = array<i64: 4, 2>, scalar_prefetch = 0 : i64, scratch_operands = 2 : i64, tpu.core_type = #tpu.core_type<tc>, window_params = [{transform_indices = @transform_0, window_bounds = array<i64: 1, 1>}, {transform_indices = @transform_1, window_bounds = array<i64: 64, 128>}, {transform_indices = @transform_2, window_bounds = array<i64: 128, 17>}, {transform_indices = @transform_3, window_bounds = array<i64: 128, 1>}, {transform_indices = @transform_4, window_bounds = array<i64: 64, 1>}]} {
    %c0_i32 = arith.constant 0 : i32
    %0 = arith.cmpi eq, %arg1, %c0_i32 : i32
    %1 = arith.extui %0 : i1 to i32
    %c0_i32_0 = arith.constant 0 : i32
    %2 = arith.cmpi ne, %1, %c0_i32_0 : i32
    scf.if %2 {
      %cst_16 = arith.constant 0.000000e+00 : f32
      %18 = vector.broadcast %cst_16 : f32 to vector<64x17xf32>
      %c0_17 = arith.constant 0 : index
      %c0_18 = arith.constant 0 : index
      %19 = vector.load %arg7[%c0_17, %c0_18] : memref<64x17xf32, #tpu.memory_space<vmem>>, vector<64x17xf32>
      tpu.vector_store %arg7[%c0_17, %c0_18], %18 {strides = array<i32>} : memref<64x17xf32, #tpu.memory_space<vmem>>, vector<64x17xf32>,
      %cst_19 = arith.constant 0.000000e+00 : f32
      %20 = vector.broadcast %cst_19 : f32 to vector<64x1xf32>
      %c0_20 = arith.constant 0 : index
      %c0_21 = arith.constant 0 : index
      %21 = vector.load %arg8[%c0_20, %c0_21] : memref<64x1xf32, #tpu.memory_space<vmem>>, vector<64x1xf32>
      tpu.vector_store %arg8[%c0_20, %c0_21], %20 {strides = array<i32>} : memref<64x1xf32, #tpu.memory_space<vmem>>, vector<64x1xf32>,
    } else {
    }
    %c0 = arith.constant 0 : index
    %c0_1 = arith.constant 0 : index
    %3 = vector.load %arg3[%c0, %c0_1] : memref<64x128xf32, #tpu.memory_space<vmem>>, vector<64x128xf32>
    %c0_2 = arith.constant 0 : index
    %c0_3 = arith.constant 0 : index
    %4 = vector.load %arg7[%c0_2, %c0_3] : memref<64x17xf32, #tpu.memory_space<vmem>>, vector<64x17xf32>
    %c0_4 = arith.constant 0 : index
    %c0_5 = arith.constant 0 : index
    %5 = vector.load %arg4[%c0_4, %c0_5] : memref<128x17xf32, #tpu.memory_space<vmem>>, vector<128x17xf32>
    %cst = arith.constant dense<0.000000e+00> : vector<64x17xf32>
    %6 = tpu.matmul %3, %5, %cst {dimension_numbers = #tpu.dot_dimension_numbers<[1], [0], [0], [1], [0, 0, 1, 1], [], []>} : vector<64x128xf32>, vector<128x17xf32>, vector<64x17xf32> -> vector<64x17xf32>
    %7 = arith.addf %4, %6 : vector<64x17xf32>
    %c0_6 = arith.constant 0 : index
    %c0_7 = arith.constant 0 : index
    %8 = vector.load %arg7[%c0_6, %c0_7] : memref<64x17xf32, #tpu.memory_space<vmem>>, vector<64x17xf32>
    tpu.vector_store %arg7[%c0_6, %c0_7], %7 {strides = array<i32>} : memref<64x17xf32, #tpu.memory_space<vmem>>, vector<64x17xf32>,
    %c0_8 = arith.constant 0 : index
    %c0_9 = arith.constant 0 : index
    %9 = vector.load %arg8[%c0_8, %c0_9] : memref<64x1xf32, #tpu.memory_space<vmem>>, vector<64x1xf32>
    %10 = arith.mulf %3, %3 : vector<64x128xf32>
    %c0_10 = arith.constant 0 : index
    %c0_11 = arith.constant 0 : index
    %11 = vector.load %arg5[%c0_10, %c0_11] : memref<128x1xf32, #tpu.memory_space<vmem>>, vector<128x1xf32>
    %cst_12 = arith.constant dense<0.000000e+00> : vector<64x1xf32>
    %12 = tpu.matmul %10, %11, %cst_12 {dimension_numbers = #tpu.dot_dimension_numbers<[1], [0], [0], [1], [0, 0, 1, 1], [], []>} : vector<64x128xf32>, vector<128x1xf32>, vector<64x1xf32> -> vector<64x1xf32>
    %13 = arith.addf %9, %12 : vector<64x1xf32>
    %c0_13 = arith.constant 0 : index
    %c0_14 = arith.constant 0 : index
    %14 = vector.load %arg8[%c0_13, %c0_14] : memref<64x1xf32, #tpu.memory_space<vmem>>, vector<64x1xf32>
    tpu.vector_store %arg8[%c0_13, %c0_14], %13 {strides = array<i32>} : memref<64x1xf32, #tpu.memory_space<vmem>>, vector<64x1xf32>,
    %c1_i32 = arith.constant 1 : i32
    %15 = arith.cmpi eq, %arg1, %c1_i32 : i32
    %16 = arith.extui %15 : i1 to i32
    %c0_i32_15 = arith.constant 0 : i32
    %17 = arith.cmpi ne, %16, %c0_i32_15 : i32
    scf.if %17 {
      %c0_16 = arith.constant 0 : index
      %c0_17 = arith.constant 0 : index
      %18 = vector.load %arg7[%c0_16, %c0_17] : memref<64x17xf32, #tpu.memory_space<vmem>>, vector<64x17xf32>
      %c0_18 = arith.constant 0 : index
      %c0_19 = arith.constant 0 : index
      %19 = memref.load %arg2[%c0_18, %c0_19] : memref<1x1xf32, #tpu.memory_space<smem>>
      %20 = vector.extract_strided_slice %18 {offsets = [0, 16], sizes = [64, 1], strides = [1, 1]} : vector<64x17xf32> to vector<64x1xf32>
      %21 = vector.broadcast %19 : f32 to vector<64x1xf32>
      %22 = arith.addf %21, %20 : vector<64x1xf32>
      %23 = vector.extract_strided_slice %18 {offsets = [0, 0], sizes = [64, 16], strides = [1, 1]} : vector<64x17xf32> to vector<64x16xf32>
      %24 = arith.mulf %23, %23 : vector<64x16xf32>
      %cst_20 = arith.constant dense<0.000000e+00> : vector<64xf32>
      %25 = vector.multi_reduction <add>, %24, %cst_20 [1] : vector<64x16xf32> to vector<64xf32>
      %26 = vector.shape_cast %25 : vector<64xf32> to vector<64x1xf32>
      %c0_21 = arith.constant 0 : index
      %c0_22 = arith.constant 0 : index
      %27 = vector.load %arg8[%c0_21, %c0_22] : memref<64x1xf32, #tpu.memory_space<vmem>>, vector<64x1xf32>
      %28 = arith.subf %26, %27 : vector<64x1xf32>
      %cst_23 = arith.constant 5.000000e-01 : f32
      %29 = vector.broadcast %cst_23 : f32 to vector<64x1xf32>
      %30 = arith.mulf %29, %28 : vector<64x1xf32>
      %31 = arith.addf %22, %30 : vector<64x1xf32>
      %c0_24 = arith.constant 0 : index
      %c0_25 = arith.constant 0 : index
      %32 = vector.load %arg6[%c0_24, %c0_25] : memref<64x1xf32, #tpu.memory_space<vmem>>, vector<64x1xf32>
      tpu.vector_store %arg6[%c0_24, %c0_25], %31 {strides = array<i32>} : memref<64x1xf32, #tpu.memory_space<vmem>>, vector<64x1xf32>,
    } else {
    }
    return
  }
  func.func @transform_0(%arg0: i32, %arg1: i32) -> (i32, i32) {
    %c0_i32 = arith.constant 0 : i32
    %c0_i32_0 = arith.constant 0 : i32
    %c0_i32_1 = arith.constant 0 : i32
    return %c0_i32, %c0_i32_0 : i32, i32
  }
  func.func @transform_1(%arg0: i32, %arg1: i32) -> (i32, i32) {
    %c0_i32 = arith.constant 0 : i32
    return %arg0, %arg1 : i32, i32
  }
  func.func @transform_2(%arg0: i32, %arg1: i32) -> (i32, i32) {
    %c0_i32 = arith.constant 0 : i32
    %c0_i32_0 = arith.constant 0 : i32
    return %arg1, %c0_i32 : i32, i32
  }
  func.func @transform_3(%arg0: i32, %arg1: i32) -> (i32, i32) {
    %c0_i32 = arith.constant 0 : i32
    %c0_i32_0 = arith.constant 0 : i32
    return %arg1, %c0_i32 : i32, i32
  }
  func.func @transform_4(%arg0: i32, %arg1: i32) -> (i32, i32) {
    %c0_i32 = arith.constant 0 : i32
    %c0_i32_0 = arith.constant 0 : i32
    return %arg0, %c0_i32 : i32, i32
  }
}

</mosaic_0001>

<llo_original>
// kernel: tpu_custom_call.1
$region0: #{tpu_custom_call.1}
  #allocation0 [shape = 'u32[]', space=smem, size = 0x4, offset = 0x4, fixed_abs, tag = 'smem constant byte address 0x4 - core index']
  #allocation1 [shape = 'u32[72,128]{1,0:T(1,128)}', space=vmem, size = 0x9000, scoped, tag = 'internal scratch']
  #allocation2 [shape = 'f32[64,17]{1,0:T(8,128)}', space=vmem, size = 0x8000, scoped, tag = 'scratch operand']
  #allocation3 [shape = 'f32[64,1]{1,0:T(8,128)}', space=vmem, size = 0x8000, scoped, tag = 'scratch operand']
  #allocation4 [shape = 'f32[1,1]{1,0:T(1,128)S(6)}', space=smem, size = 0x200, scoped, tag = 'scoped memory for tpu_custom_call.1']
  %s0 = inlined_call_operand.<no memory space> [shape: f32[1,1], index: 0, kind: input, shape index: {}]
  %s1 = inlined_call_operand.vmem [shape: f32[256,256], index: 1, kind: input, shape index: {}]
  %s2 = inlined_call_operand.vmem [shape: f32[256,17], index: 2, kind: input, shape index: {}]
  %s3 = inlined_call_operand.vmem [shape: f32[256,1], index: 3, kind: input, shape index: {}]
  %s4 = inlined_call_operand.vmem [shape: f32[256,1], index: 4, kind: output, shape index: {}]
  %s5 = sld [smem:[#allocation0]]
  $region95: #{tpu_custom_call.1} parent=0
    _
  %s7 = ssub.s32 1, %s5
  %s8 = scalar_select 0, %s7, %s5
  %9 = sst [smem:[#allocation4]] %s0
  $region1: #{tpu_custom_call.1} parent=0
    #allocation5 [shape = 'u8[65536]{0}', space=vmem, size = 0x10000, scoped, tag = 'input window, operand 1']
    loop: start=0, step=1, limit=10
    $region2: #{tpu_custom_call.1} parent=1 // loop_pre_header
      _
    $region3: #{tpu_custom_call.1} parent=1 // loop_header
      %s11 = sphi 0, %s15
      %p12 = scmp.ge.s32.totalorder %s11, 10
      %s18 = sphi 0, %s30
      %s19 = sphi 0, %s26
      %s20 = sphi 0, %s18
      %s21 = sphi 0, %s19
      %s22 = sphi 0, %s20
      %s23 = sphi 0, %s21
      %s31 = sphi 0, %s31
      %s33 = sphi 0, %s31
      %s34 = sphi 0, %s33
      %s48 = sphi 0, %s34
      %s56 = sphi 0, %s58
      %s59 = sphi 0, %s56
      %s60 = sphi 0, %s59
      %s76 = sphi 0, %s60
      %s82 = sphi 0, %s84
      %s85 = sphi 0, %s82
      %s86 = sphi 0, %s85
      %s102 = sphi 0, %s86
      %s108 = sphi 0, %s110
      %s111 = sphi 0, %s108
      %s112 = sphi 0, %s111
      %s128 = sphi 0, %s112
      %s134 = sphi 0, %s136
      %s137 = sphi 0, %s134
      %s138 = sphi 0, %s137
      %s154 = sphi 0, %s138
    $region4: #{tpu_custom_call.1} parent=1 // loop_header_branch
      %14 = sbr.rel (%p12) target = $region8
    $region5: #{tpu_custom_call.1} parent=1 // loop_body
      %s16 = ssub.s32 %s11, 1
      %s17 = ssub.s32 %s11, 2
      %s24 = sadd.s32 1, %s19
      %p25 = scmp.ge.s32.totalorder %s24, 2
      %s26 = scalar_select %p25, 0, %s24
      %s27 = sadd.s32 1, %s18
      %s28 = scalar_select %p25, %s27, %s18
      %p29 = scmp.ge.s32.totalorder %s28, 4
      %s30 = scalar_select %p29, 0, %s28
      %s32 = sadd.s32 %s31, 1
      %p35 = scmp.eq.s32.totalorder %s11, 7
      %p36 = scmp.ne.s32.totalorder %s31, %s33
      %p37 = scmp.eq.s32.totalorder %s11, 0
      %p38 = por %p36, %p37
      %p39 = scmp.ne.s32.totalorder %s31, %s33
      %p40 = scmp.eq.s32.totalorder %s16, 7
      %p41 = por %p39, %p40
      %p42 = scmp.ne.s32.totalorder %s33, %s34
      %p43 = scmp.eq.s32.totalorder %s16, 0
      %p44 = por %p42, %p43
      %p45 = scmp.ne.s32.totalorder %s33, %s34
      %p46 = scmp.eq.s32.totalorder %s17, 7
      %p47 = por %p45, %p46
      %p49 = scmp.ne.s32.totalorder %s34, %s48
      %p50 = scmp.eq.s32.totalorder %s17, 0
      %p51 = por %p49, %p50
      %s52 = ssub.s32 %s18, %s30
      %s53 = ssub.s32 %s19, %s26
      %s54 = sor.u32 %s52, %s53
      %p55 = scmp.eq.s32.totalorder %s54, 0
      %s57 = sadd.s32 %s56, 1
      %s58 = scalar_select %p55, %s56, %s57
      %p61 = pneg %p55
      %p62 = scmp.eq.s32.totalorder %s11, 7
      %p63 = por %p61, %p62
      %p64 = scmp.ne.s32.totalorder %s56, %s59
      %p65 = scmp.eq.s32.totalorder %s11, 0
      %p66 = por %p64, %p65
      %p67 = scmp.ne.s32.totalorder %s56, %s59
      %p68 = scmp.eq.s32.totalorder %s16, 7
      %p69 = por %p67, %p68
      %p70 = scmp.ne.s32.totalorder %s59, %s60
      %p71 = scmp.eq.s32.totalorder %s16, 0
      %p72 = por %p70, %p71
      %p73 = scmp.ne.s32.totalorder %s59, %s60
      %p74 = scmp.eq.s32.totalorder %s17, 7
      %p75 = por %p73, %p74
      %p77 = scmp.ne.s32.totalorder %s60, %s76
      %p78 = scmp.eq.s32.totalorder %s17, 0
      %p79 = por %p77, %p78
      %s80 = ssub.s32 %s19, %s26
      %p81 = scmp.eq.s32.totalorder %s80, 0
      %s83 = sadd.s32 %s82, 1
      %s84 = scalar_select %p81, %s82, %s83
      %p87 = pneg %p81
      %p88 = scmp.eq.s32.totalorder %s11, 7
      %p89 = por %p87, %p88
      %p90 = scmp.ne.s32.totalorder %s82, %s85
      %p91 = scmp.eq.s32.totalorder %s11, 0
      %p92 = por %p90, %p91
      %p93 = scmp.ne.s32.totalorder %s82, %s85
      %p94 = scmp.eq.s32.totalorder %s16, 7
      %p95 = por %p93, %p94
      %p96 = scmp.ne.s32.totalorder %s85, %s86
      %p97 = scmp.eq.s32.totalorder %s16, 0
      %p98 = por %p96, %p97
      %p99 = scmp.ne.s32.totalorder %s85, %s86
      %p100 = scmp.eq.s32.totalorder %s17, 7
      %p101 = por %p99, %p100
      %p103 = scmp.ne.s32.totalorder %s86, %s102
      %p104 = scmp.eq.s32.totalorder %s17, 0
      %p105 = por %p103, %p104
      %s106 = ssub.s32 %s19, %s26
      %p107 = scmp.eq.s32.totalorder %s106, 0
      %s109 = sadd.s32 %s108, 1
      %s110 = scalar_select %p107, %s108, %s109
      %p113 = pneg %p107
      %p114 = scmp.eq.s32.totalorder %s11, 7
      %p115 = por %p113, %p114
      %p116 = scmp.ne.s32.totalorder %s108, %s111
      %p117 = scmp.eq.s32.totalorder %s11, 0
      %p118 = por %p116, %p117
      %p119 = scmp.ne.s32.totalorder %s108, %s111
      %p120 = scmp.eq.s32.totalorder %s16, 7
      %p121 = por %p119, %p120
      %p122 = scmp.ne.s32.totalorder %s111, %s112
      %p123 = scmp.eq.s32.totalorder %s16, 0
      %p124 = por %p122, %p123
      %p125 = scmp.ne.s32.totalorder %s111, %s112
      %p126 = scmp.eq.s32.totalorder %s17, 7
      %p127 = por %p125, %p126
      %p129 = scmp.ne.s32.totalorder %s112, %s128
      %p130 = scmp.eq.s32.totalorder %s17, 0
      %p131 = por %p129, %p130
      %s132 = ssub.s32 %s18, %s30
      %p133 = scmp.eq.s32.totalorder %s132, 0
      %s135 = sadd.s32 %s134, 1
      %s136 = scalar_select %p133, %s134, %s135
      %p139 = pneg %p133
      %p140 = scmp.eq.s32.totalorder %s11, 7
      %p141 = por %p139, %p140
      %p142 = scmp.ne.s32.totalorder %s134, %s137
      %p143 = scmp.eq.s32.totalorder %s11, 0
      %p144 = por %p142, %p143
      %p145 = scmp.ne.s32.totalorder %s134, %s137
      %p146 = scmp.eq.s32.totalorder %s16, 7
      %p147 = por %p145, %p146
      %p148 = scmp.ne.s32.totalorder %s137, %s138
      %p149 = scmp.eq.s32.totalorder %s16, 0
      %p150 = por %p148, %p149
      %p151 = scmp.ne.s32.totalorder %s137, %s138
      %p152 = scmp.eq.s32.totalorder %s17, 7
      %p153 = por %p151, %p152
      %p155 = scmp.ne.s32.totalorder %s138, %s154
      %p156 = scmp.eq.s32.totalorder %s17, 0
      %p157 = por %p155, %p156
      %p158 = scmp.le.s32.totalorder 1, %s11
      %p159 = scmp.lt.s32.totalorder %s11, 9
      %p160 = pnand %p158, %p159
      %p161 = pneg %p160
      // Predicated region
      $region9: #{tpu_custom_call.1} parent=5 // pred_check
        _
      $region10: #{tpu_custom_call.1} parent=5 // pred_check_branch
        %163 = sbr.rel (%p160) target = $region12
      $region11: #{tpu_custom_call.1} parent=5 // pred_region
        %s164 = ssub.s32 %s11, 1
        // Predicated region
        $region13: #{tpu_custom_call.1} parent=11 // pred_check
          %p165 = pneg %p44
        $region14: #{tpu_custom_call.1} parent=11 // pred_check_branch
          %167 = sbr.rel (%p165) target = $region16
        $region15: #{tpu_custom_call.1} parent=11 // pred_region
          _
        $region16: #{tpu_custom_call.1} parent=11 // pred_fallthru
          _
      $region12: #{tpu_custom_call.1} parent=5 // pred_fallthru
        _
      %p168 = scmp.lt.s32.totalorder %s11, 8
      // Predicated region
      $region17: #{tpu_custom_call.1} parent=5 // pred_check
        %p169 = pneg %p168
      $region18: #{tpu_custom_call.1} parent=5 // pred_check_branch
        %171 = sbr.rel (%p169) target = $region20
      $region19: #{tpu_custom_call.1} parent=5 // pred_region
        // Predicated region
        $region21: #{tpu_custom_call.1} parent=19 // pred_check
          %p172 = pneg %p66
        $region22: #{tpu_custom_call.1} parent=19 // pred_check_branch
          %174 = sbr.rel (%p172) target = $region24
        $region23: #{tpu_custom_call.1} parent=19 // pred_region
          %s175 = sand.u32 %s56, 1
          %s176 = sand.u32 %s56, 1
          %s177 = smul.addr %s176, 64
          %s178 = scalar_lea.vmem [#allocation5], %s177
          %s179 = smul.u32 8, %s18
          %s180 = smul.addr %s179, 2
          %s181 = sadd.s32 %s19, %s180
          %s182 = smul.addr %s181, 8
          %s183 = scalar_lea.vmem %s1, %s182
          // Predicated region
          $region25: #{tpu_custom_call.1} parent=23 // pred_check
            _
          $region26: #{tpu_custom_call.1} parent=23 // pred_check_branch
            %185 = sbr.rel (0) target = $region28
          $region27: #{tpu_custom_call.1} parent=23 // pred_region
            // Predicated region
            $region29: #{tpu_custom_call.1} parent=27 // pred_check
              _
            $region30: #{tpu_custom_call.1} parent=27 // pred_check_branch
              %187 = sbr.rel (0) target = $region32
            $region31: #{tpu_custom_call.1} parent=27 // pred_region
              // Predicated region
              $region44: #{tpu_custom_call.1} parent=31 // pred_check
                _
              $region45: #{tpu_custom_call.1} parent=31 // pred_check_branch
                %217 = sbr.rel (0) target = $region47
              $region46: #{tpu_custom_call.1} parent=31 // pred_region
                loop: start=0, step=1, limit=1
                $region48: #{tpu_custom_call.1} parent=46 // loop_pre_header
                  _
                $region49: #{tpu_custom_call.1} parent=46 // loop_header
                  %s219 = sphi 0, %s223
                  %p220 = scmp.ge.s32.totalorder %s219, 1
                  %s224 = sphi %s183, %s183
                  %s225 = sphi %s178, %s178
                $region50: #{tpu_custom_call.1} parent=46 // loop_header_branch
                  %222 = sbr.rel (%p220) target = $region54
                $region51: #{tpu_custom_call.1} parent=46 // loop_body
                  %v226 = vld [vmem:[%s224] sm:$0xff]
                  %227 = vst [vmem:[%s225] sm:$0xff] %v226
                  %v228 = vld [vmem:[%s224 + $0x10] sm:$0xff]
                  %229 = vst [vmem:[%s225 + $0x8] sm:$0xff] %v228
                  %v230 = vld [vmem:[%s224 + $0x20] sm:$0xff]
                  %231 = vst [vmem:[%s225 + $0x10] sm:$0xff] %v230
                  %v232 = vld [vmem:[%s224 + $0x30] sm:$0xff]
                  %233 = vst [vmem:[%s225 + $0x18] sm:$0xff] %v232
                  %v234 = vld [vmem:[%s224 + $0x40] sm:$0xff]
                  %235 = vst [vmem:[%s225 + $0x20] sm:$0xff] %v234
                  %v236 = vld [vmem:[%s224 + $0x50] sm:$0xff]
                  %237 = vst [vmem:[%s225 + $0x28] sm:$0xff] %v236
                  %v238 = vld [vmem:[%s224 + $0x60] sm:$0xff]
                  %239 = vst [vmem:[%s225 + $0x30] sm:$0xff] %v238
                  %v240 = vld [vmem:[%s224 + $0x70] sm:$0xff]
                  %241 = vst [vmem:[%s225 + $0x38] sm:$0xff] %v240
                $region52: #{tpu_custom_call.1} parent=46 // loop_footer
                  %s223 = sadd.s32 1, %s219
                $region53: #{tpu_custom_call.1} parent=46 // loop_footer_branch
                  %218 = sbr.rel target = $region49
                $region54: #{tpu_custom_call.1} parent=46 // loop_exit
                  _
              $region47: #{tpu_custom_call.1} parent=31 // pred_fallthru
                _
              // Predicated region
              $region55: #{tpu_custom_call.1} parent=31 // pred_check
                _
              $region56: #{tpu_custom_call.1} parent=31 // pred_check_branch
                %243 = sbr.rel target = $region58
              $region57: #{tpu_custom_call.1} parent=31 // pred_region
                _
              $region58: #{tpu_custom_call.1} parent=31 // pred_fallthru
                _
            $region32: #{tpu_custom_call.1} parent=27 // pred_fallthru
              _
            // Predicated region
            $region33: #{tpu_custom_call.1} parent=27 // pred_check
              _
            $region34: #{tpu_custom_call.1} parent=27 // pred_check_branch
              %189 = sbr.rel target = $region36
            $region35: #{tpu_custom_call.1} parent=27 // pred_region
              %s191 = ssub.s32 256, 1
              loop: start=0, step=1, limit=1
              $region37: #{tpu_custom_call.1} parent=35 // loop_pre_header
                _
              $region38: #{tpu_custom_call.1} parent=35 // loop_header
                %s193 = sphi 0, %s197
                %p194 = scmp.ge.s32.totalorder %s193, 1
                %s198 = sphi %s183, %s183
                %s199 = sphi %s178, %s178
              $region39: #{tpu_custom_call.1} parent=35 // loop_header_branch
                %196 = sbr.rel (%p194) target = $region43
              $region40: #{tpu_custom_call.1} parent=35 // loop_body
                %v200 = vld [vmem:[%s198] sm:%s191]
                %201 = vst [vmem:[%s199] sm:%s191] %v200
                %v202 = vld [vmem:[%s198 + $0x10] sm:%s191]
                %203 = vst [vmem:[%s199 + $0x8] sm:%s191] %v202
                %v204 = vld [vmem:[%s198 + $0x20] sm:%s191]
                %205 = vst [vmem:[%s199 + $0x10] sm:%s191] %v204
                %v206 = vld [vmem:[%s198 + $0x30] sm:%s191]
                %207 = vst [vmem:[%s199 + $0x18] sm:%s191] %v206
                %v208 = vld [vmem:[%s198 + $0x40] sm:%s191]
                %209 = vst [vmem:[%s199 + $0x20] sm:%s191] %v208
                %v210 = vld [vmem:[%s198 + $0x50] sm:%s191]
                %211 = vst [vmem:[%s199 + $0x28] sm:%s191] %v210
                %v212 = vld [vmem:[%s198 + $0x60] sm:%s191]
                %213 = vst [vmem:[%s199 + $0x30] sm:%s191] %v212
                %v214 = vld [vmem:[%s198 + $0x70] sm:%s191]
                %215 = vst [vmem:[%s199 + $0x38] sm:%s191] %v214
              $region41: #{tpu_custom_call.1} parent=35 // loop_footer
                %s197 = sadd.s32 1, %s193
              $region42: #{tpu_custom_call.1} parent=35 // loop_footer_branch
                %192 = sbr.rel target = $region38
              $region43: #{tpu_custom_call.1} parent=35 // loop_exit
                _
            $region36: #{tpu_custom_call.1} parent=27 // pred_fallthru
              _
          $region28: #{tpu_custom_call.1} parent=23 // pred_fallthru
            _
          %244 = vnop
        $region24: #{tpu_custom_call.1} parent=19 // pred_fallthru
          _
        // Predicated region
        $region59: #{tpu_custom_call.1} parent=19 // pred_check
          %p245 = pneg %p92
        $region60: #{tpu_custom_call.1} parent=19 // pred_check_branch
          %247 = sbr.rel (%p245) target = $region62
        $region61: #{tpu_custom_call.1} parent=19 // pred_region
          %s248 = smul.u32 16, %s19
          %p249 = scmp.lt.s32.totalorder %s248, 31
          %s250 = scalar_select %p249, %s248, 31
          %s251 = smul.addr %s250, 8
          %s252 = scalar_lea.vmem %s2, %s251
          %s253 = smul.u32 16, %s19
        $region62: #{tpu_custom_call.1} parent=19 // pred_fallthru
          _
        // Predicated region
        $region63: #{tpu_custom_call.1} parent=19 // pred_check
          %p254 = pneg %p118
        $region64: #{tpu_custom_call.1} parent=19 // pred_check_branch
          %256 = sbr.rel (%p254) target = $region66
        $region65: #{tpu_custom_call.1} parent=19 // pred_region
          %s257 = smul.u32 16, %s19
          %p258 = scmp.lt.s32.totalorder %s257, 31
          %s259 = scalar_select %p258, %s257, 31
          %s260 = smul.addr %s259, 8
          %s261 = scalar_lea.vmem %s3, %s260
          %s262 = smul.u32 16, %s19
        $region66: #{tpu_custom_call.1} parent=19 // pred_fallthru
          _
      $region20: #{tpu_custom_call.1} parent=5 // pred_fallthru
        _
      %p263 = scmp.le.s32.totalorder 1, %s11
      %p264 = scmp.lt.s32.totalorder %s11, 9
      %p265 = pnand %p263, %p264
      %p266 = pneg %p265
      // Predicated region
      $region67: #{tpu_custom_call.1} parent=5 // pred_check
        _
      $region68: #{tpu_custom_call.1} parent=5 // pred_check_branch
        %268 = sbr.rel (%p265) target = $region70
      $region69: #{tpu_custom_call.1} parent=5 // pred_region
        %s269 = ssub.s32 %s11, 1
        %s270 = sand.u32 %s59, 1
        %s271 = sand.u32 %s59, 1
        %s272 = smul.addr %s271, 64
        %s273 = scalar_lea.vmem [#allocation5], %s272
        // Predicated region
        $region71: #{tpu_custom_call.1} parent=69 // pred_check
          %p274 = pneg %p72
        $region72: #{tpu_custom_call.1} parent=69 // pred_check_branch
          %276 = sbr.rel (%p274) target = $region74
        $region73: #{tpu_custom_call.1} parent=69 // pred_region
          _
        $region74: #{tpu_custom_call.1} parent=69 // pred_fallthru
          _
        %p277 = pneg %p44
        %p278 = pneg %p41
        %s279 = sand.u32 %s59, 1
        %s280 = sand.u32 %s59, 1
        %s281 = smul.addr %s280, 64
        %s282 = scalar_lea.vmem [#allocation5], %s281
        %p283 = pneg %p72
        %p284 = pneg %p69
        %s285 = smul.u32 16, %s21
        %p286 = scmp.lt.s32.totalorder %s285, 31
        %s287 = scalar_select %p286, %s285, 31
        %s288 = smul.addr %s287, 8
        %s289 = scalar_lea.vmem %s2, %s288
        %p290 = pneg %p98
        %p291 = pneg %p95
        %s292 = smul.u32 16, %s21
        %p293 = scmp.lt.s32.totalorder %s292, 31
        %s294 = scalar_select %p293, %s292, 31
        %s295 = smul.addr %s294, 8
        %s296 = scalar_lea.vmem %s3, %s295
        %p297 = pneg %p124
        %p298 = pneg %p121
        %p299 = pneg %p150
        %p300 = pneg %p147
        %s301 = smul.u32 8, %s20
        %p302 = scmp.lt.s32.totalorder %s301, 31
        %s303 = scalar_select %p302, %s301, 31
        %s304 = smul.addr %s303, 8
        %s305 = scalar_lea.vmem %s4, %s304
        %s306 = smul.u32 8, %s20
        %s307 = smul.u32 16, %s21
        %p308 = scmp.lt.s32.totalorder %s307, 31
        %s309 = scalar_select %p308, %s307, 31
        %s310 = smul.addr %s309, 8
        %s311 = scalar_lea.vmem %s2, %s310
        %s312 = smul.u32 16, %s21
        %s313 = smul.u32 16, %s21
        %p314 = scmp.lt.s32.totalorder %s313, 31
        %s315 = scalar_select %p314, %s313, 31
        %s316 = smul.addr %s315, 8
        %s317 = scalar_lea.vmem %s3, %s316
        %s318 = smul.u32 16, %s21
        %s319 = smul.u32 8, %s20
        %p320 = scmp.lt.s32.totalorder %s319, 31
        %s321 = scalar_select %p320, %s319, 31
        %s322 = smul.addr %s321, 8
        %s323 = scalar_lea.vmem %s4, %s322
        %s324 = smul.u32 8, %s20
        %p325 = scmp.eq.s32.totalorder %s21, 0
        // Predicated region
        $region75: #{tpu_custom_call.1} parent=69 // pred_check
          %p326 = pneg %p325
        $region76: #{tpu_custom_call.1} parent=69 // pred_check_branch
          %328 = sbr.rel (%p326) target = $region78
        $region77: #{tpu_custom_call.1} parent=69 // pred_region
          %vm329 = vcmask 138240
          %330 = vst.msk [vmem:[#allocation2] sm:$0xff] %vm329, 0.0
          %331 = vst.msk [vmem:[#allocation2 + $0x8] sm:$0xff] %vm329, 0.0
          %332 = vst.msk [vmem:[#allocation2 + $0x10] sm:$0xff] %vm329, 0.0
          %333 = vst.msk [vmem:[#allocation2 + $0x18] sm:$0xff] %vm329, 0.0
          %334 = vst.msk [vmem:[#allocation2 + $0x20] sm:$0xff] %vm329, 0.0
          %335 = vst.msk [vmem:[#allocation2 + $0x28] sm:$0xff] %vm329, 0.0
          %336 = vst.msk [vmem:[#allocation2 + $0x30] sm:$0xff] %vm329, 0.0
          %337 = vst.msk [vmem:[#allocation2 + $0x38] sm:$0xff] %vm329, 0.0
          %vm338 = vcmask 7168
          %339 = vst.msk [vmem:[#allocation3] sm:$0xff] %vm338, 0.0
          %340 = vst.msk [vmem:[#allocation3 + $0x8] sm:$0xff] %vm338, 0.0
          %341 = vst.msk [vmem:[#allocation3 + $0x10] sm:$0xff] %vm338, 0.0
          %342 = vst.msk [vmem:[#allocation3 + $0x18] sm:$0xff] %vm338, 0.0
          %343 = vst.msk [vmem:[#allocation3 + $0x20] sm:$0xff] %vm338, 0.0
          %344 = vst.msk [vmem:[#allocation3 + $0x28] sm:$0xff] %vm338, 0.0
          %345 = vst.msk [vmem:[#allocation3 + $0x30] sm:$0xff] %vm338, 0.0
          %346 = vst.msk [vmem:[#allocation3 + $0x38] sm:$0xff] %vm338, 0.0
        $region78: #{tpu_custom_call.1} parent=69 // pred_fallthru
          _
        %v347 = vld [vmem:[%s273] sm:$0xff]
        %v348 = vld [vmem:[%s273 + $0x8] sm:$0xff]
        %v349 = vld [vmem:[%s273 + $0x10] sm:$0xff]
        %v350 = vld [vmem:[%s273 + $0x18] sm:$0xff]
        %v351 = vld [vmem:[%s273 + $0x20] sm:$0xff]
        %v352 = vld [vmem:[%s273 + $0x28] sm:$0xff]
        %v353 = vld [vmem:[%s273 + $0x30] sm:$0xff]
        %v354 = vld [vmem:[%s273 + $0x38] sm:$0xff]
        %v355 = vld [vmem:[#allocation2] sm:$0xff]
        %v356 = vld [vmem:[#allocation2 + $0x8] sm:$0xff]
        %v357 = vld [vmem:[#allocation2 + $0x10] sm:$0xff]
        %v358 = vld [vmem:[#allocation2 + $0x18] sm:$0xff]
        %v359 = vld [vmem:[#allocation2 + $0x20] sm:$0xff]
        %v360 = vld [vmem:[#allocation2 + $0x28] sm:$0xff]
        %v361 = vld [vmem:[#allocation2 + $0x30] sm:$0xff]
        %v362 = vld [vmem:[#allocation2 + $0x38] sm:$0xff]
        %v363 = vld [vmem:[%s311] sm:$0xff]
        %v364 = vld [vmem:[%s311 + $0x8] sm:$0xff]
        %v365 = vld [vmem:[%s311 + $0x10] sm:$0xff]
        %v366 = vld [vmem:[%s311 + $0x18] sm:$0xff]
        %v367 = vld [vmem:[%s311 + $0x20] sm:$0xff]
        %v368 = vld [vmem:[%s311 + $0x28] sm:$0xff]
        %v369 = vld [vmem:[%s311 + $0x30] sm:$0xff]
        %v370 = vld [vmem:[%s311 + $0x38] sm:$0xff]
        %v371 = vld [vmem:[%s311 + $0x40] sm:$0xff]
        %v372 = vld [vmem:[%s311 + $0x48] sm:$0xff]
        %v373 = vld [vmem:[%s311 + $0x50] sm:$0xff]
        %v374 = vld [vmem:[%s311 + $0x58] sm:$0xff]
        %v375 = vld [vmem:[%s311 + $0x60] sm:$0xff]
        %v376 = vld [vmem:[%s311 + $0x68] sm:$0xff]
        %v377 = vld [vmem:[%s311 + $0x70] sm:$0xff]
        %v378 = vld [vmem:[%s311 + $0x78] sm:$0xff]
        %379 = vmatpush.msra.mxu0 %v378
        %380 = vmatpush.msra.mxu0 %v377
        %381 = vmatpush.msra.mxu0 %v376
        %382 = vmatpush.msra.mxu0 %v375
        %383 = vmatpush.msra.mxu0 %v374
        %384 = vmatpush.msra.mxu0 %v373
        %385 = vmatpush.msra.mxu0 %v372
        %386 = vmatpush.msra.mxu0 %v371
        %387 = vmatpush.msra.mxu0 %v370
        %388 = vmatpush.msra.mxu0 %v369
        %389 = vmatpush.msra.mxu0 %v368
        %390 = vmatpush.msra.mxu0 %v367
        %391 = vmatpush.msra.mxu0 %v366
        %392 = vmatpush.msra.mxu0 %v365
        %393 = vmatpush.msra.mxu0 %v364
        %394 = vmatpush.msra.mxu0 %v363
        %395 = vmatmul.f32.gmra.mxu0 %v347
        %v396 = vpop.f32.mrf.mxu0
        %v397 = vadd.f32 0.0, %v396
        %398 = vmatmul.f32.gmra.mxu0 %v348
        %v399 = vpop.f32.mrf.mxu0
        %v400 = vadd.f32 0.0, %v399
        %401 = vmatmul.f32.gmra.mxu0 %v349
        %v402 = vpop.f32.mrf.mxu0
        %v403 = vadd.f32 0.0, %v402
        %404 = vmatmul.f32.gmra.mxu0 %v350
        %v405 = vpop.f32.mrf.mxu0
        %v406 = vadd.f32 0.0, %v405
        %407 = vmatmul.f32.gmra.mxu0 %v351
        %v408 = vpop.f32.mrf.mxu0
        %v409 = vadd.f32 0.0, %v408
        %410 = vmatmul.f32.gmra.mxu0 %v352
        %v411 = vpop.f32.mrf.mxu0
        %v412 = vadd.f32 0.0, %v411
        %413 = vmatmul.f32.gmra.mxu0 %v353
        %v414 = vpop.f32.mrf.mxu0
        %v415 = vadd.f32 0.0, %v414
        %416 = vmatmul.f32.gmra.mxu0 %v354
        %v417 = vpop.f32.mrf.mxu0
        %v418 = vadd.f32 0.0, %v417
        %419 = vdwg.mxu0
        %v420 = vadd.f32 %v355, %v397
        %v421 = vadd.f32 %v356, %v400
        %v422 = vadd.f32 %v357, %v403
        %v423 = vadd.f32 %v358, %v406
        %v424 = vadd.f32 %v359, %v409
        %v425 = vadd.f32 %v360, %v412
        %v426 = vadd.f32 %v361, %v415
        %v427 = vadd.f32 %v362, %v418
        %vm428 = vcmask 138240
        %429 = vst.msk [vmem:[#allocation2] sm:$0xff] %vm428, %v420
        %430 = vst.msk [vmem:[#allocation2 + $0x8] sm:$0xff] %vm428, %v421
        %431 = vst.msk [vmem:[#allocation2 + $0x10] sm:$0xff] %vm428, %v422
        %432 = vst.msk [vmem:[#allocation2 + $0x18] sm:$0xff] %vm428, %v423
        %433 = vst.msk [vmem:[#allocation2 + $0x20] sm:$0xff] %vm428, %v424
        %434 = vst.msk [vmem:[#allocation2 + $0x28] sm:$0xff] %vm428, %v425
        %435 = vst.msk [vmem:[#allocation2 + $0x30] sm:$0xff] %vm428, %v426
        %436 = vst.msk [vmem:[#allocation2 + $0x38] sm:$0xff] %vm428, %v427
        %v437 = vld [vmem:[#allocation3] sm:$0xff]
        %v438 = vld [vmem:[#allocation3 + $0x8] sm:$0xff]
        %v439 = vld [vmem:[#allocation3 + $0x10] sm:$0xff]
        %v440 = vld [vmem:[#allocation3 + $0x18] sm:$0xff]
        %v441 = vld [vmem:[#allocation3 + $0x20] sm:$0xff]
        %v442 = vld [vmem:[#allocation3 + $0x28] sm:$0xff]
        %v443 = vld [vmem:[#allocation3 + $0x30] sm:$0xff]
        %v444 = vld [vmem:[#allocation3 + $0x38] sm:$0xff]
        %v445 = vmul.f32 %v347, %v347
        %v446 = vmul.f32 %v348, %v348
        %v447 = vmul.f32 %v349, %v349
        %v448 = vmul.f32 %v350, %v350
        %v449 = vmul.f32 %v351, %v351
        %v450 = vmul.f32 %v352, %v352
        %v451 = vmul.f32 %v353, %v353
        %v452 = vmul.f32 %v354, %v354
        %v453 = vld [vmem:[%s317] sm:$0xff]
        %v454 = vld [vmem:[%s317 + $0x8] sm:$0xff]
        %v455 = vld [vmem:[%s317 + $0x10] sm:$0xff]
        %v456 = vld [vmem:[%s317 + $0x18] sm:$0xff]
        %v457 = vld [vmem:[%s317 + $0x20] sm:$0xff]
        %v458 = vld [vmem:[%s317 + $0x28] sm:$0xff]
        %v459 = vld [vmem:[%s317 + $0x30] sm:$0xff]
        %v460 = vld [vmem:[%s317 + $0x38] sm:$0xff]
        %v461 = vld [vmem:[%s317 + $0x40] sm:$0xff]
        %v462 = vld [vmem:[%s317 + $0x48] sm:$0xff]
        %v463 = vld [vmem:[%s317 + $0x50] sm:$0xff]
        %v464 = vld [vmem:[%s317 + $0x58] sm:$0xff]
        %v465 = vld [vmem:[%s317 + $0x60] sm:$0xff]
        %v466 = vld [vmem:[%s317 + $0x68] sm:$0xff]
        %v467 = vld [vmem:[%s317 + $0x70] sm:$0xff]
        %v468 = vld [vmem:[%s317 + $0x78] sm:$0xff]
        %469 = vmatpush.msra.mxu0 %v468
        %470 = vmatpush.msra.mxu0 %v467
        %471 = vmatpush.msra.mxu0 %v466
        %472 = vmatpush.msra.mxu0 %v465
        %473 = vmatpush.msra.mxu0 %v464
        %474 = vmatpush.msra.mxu0 %v463
        %475 = vmatpush.msra.mxu0 %v462
        %476 = vmatpush.msra.mxu0 %v461
        %477 = vmatpush.msra.mxu0 %v460
        %478 = vmatpush.msra.mxu0 %v459
        %479 = vmatpush.msra.mxu0 %v458
        %480 = vmatpush.msra.mxu0 %v457
        %481 = vmatpush.msra.mxu0 %v456
        %482 = vmatpush.msra.mxu0 %v455
        %483 = vmatpush.msra.mxu0 %v454
        %484 = vmatpush.msra.mxu0 %v453
        %485 = vmatmul.f32.gmra.mxu0 %v445
        %v486 = vpop.f32.mrf.mxu0
        %v487 = vadd.f32 0.0, %v486
        %488 = vmatmul.f32.gmra.mxu0 %v446
        %v489 = vpop.f32.mrf.mxu0
        %v490 = vadd.f32 0.0, %v489
        %491 = vmatmul.f32.gmra.mxu0 %v447
        %v492 = vpop.f32.mrf.mxu0
        %v493 = vadd.f32 0.0, %v492
        %494 = vmatmul.f32.gmra.mxu0 %v448
        %v495 = vpop.f32.mrf.mxu0
        %v496 = vadd.f32 0.0, %v495
        %497 = vmatmul.f32.gmra.mxu0 %v449
        %v498 = vpop.f32.mrf.mxu0
        %v499 = vadd.f32 0.0, %v498
        %500 = vmatmul.f32.gmra.mxu0 %v450
        %v501 = vpop.f32.mrf.mxu0
        %v502 = vadd.f32 0.0, %v501
        %503 = vmatmul.f32.gmra.mxu0 %v451
        %v504 = vpop.f32.mrf.mxu0
        %v505 = vadd.f32 0.0, %v504
        %506 = vmatmul.f32.gmra.mxu0 %v452
        %v507 = vpop.f32.mrf.mxu0
        %v508 = vadd.f32 0.0, %v507
        %509 = vdwg.mxu0
        %v510 = vadd.f32 %v437, %v487
        %v511 = vadd.f32 %v438, %v490
        %v512 = vadd.f32 %v439, %v493
        %v513 = vadd.f32 %v440, %v496
        %v514 = vadd.f32 %v441, %v499
        %v515 = vadd.f32 %v442, %v502
        %v516 = vadd.f32 %v443, %v505
        %v517 = vadd.f32 %v444, %v508
        %vm518 = vcmask 7168
        %519 = vst.msk [vmem:[#allocation3] sm:$0xff] %vm518, %v510
        %520 = vst.msk [vmem:[#allocation3 + $0x8] sm:$0xff] %vm518, %v511
        %521 = vst.msk [vmem:[#allocation3 + $0x10] sm:$0xff] %vm518, %v512
        %522 = vst.msk [vmem:[#allocation3 + $0x18] sm:$0xff] %vm518, %v513
        %523 = vst.msk [vmem:[#allocation3 + $0x20] sm:$0xff] %vm518, %v514
        %524 = vst.msk [vmem:[#allocation3 + $0x28] sm:$0xff] %vm518, %v515
        %525 = vst.msk [vmem:[#allocation3 + $0x30] sm:$0xff] %vm518, %v516
        %526 = vst.msk [vmem:[#allocation3 + $0x38] sm:$0xff] %vm518, %v517
        %p527 = scmp.eq.s32.totalorder %s21, 1
        // Predicated region
        $region79: #{tpu_custom_call.1} parent=69 // pred_check
          %p528 = pneg %p527
        $region80: #{tpu_custom_call.1} parent=69 // pred_check_branch
          %530 = sbr.rel (%p528) target = $region82
        $region81: #{tpu_custom_call.1} parent=69 // pred_region
          %v531 = vld [vmem:[#allocation2] sm:$0xff]
          %v532 = vld [vmem:[#allocation2 + $0x8] sm:$0xff]
          %v533 = vld [vmem:[#allocation2 + $0x10] sm:$0xff]
          %v534 = vld [vmem:[#allocation2 + $0x18] sm:$0xff]
          %v535 = vld [vmem:[#allocation2 + $0x20] sm:$0xff]
          %v536 = vld [vmem:[#allocation2 + $0x28] sm:$0xff]
          %v537 = vld [vmem:[#allocation2 + $0x30] sm:$0xff]
          %v538 = vld [vmem:[#allocation2 + $0x38] sm:$0xff]
          %s539 = sld [smem:[#allocation4]]
          %v540 = vstv %s539
          %v541 = vadd.f32 %v540, %v531
          %v542 = vadd.f32 %v540, %v532
          %v543 = vadd.f32 %v540, %v533
          %v544 = vadd.f32 %v540, %v534
          %v545 = vadd.f32 %v540, %v535
          %v546 = vadd.f32 %v540, %v536
          %v547 = vadd.f32 %v540, %v537
          %v548 = vadd.f32 %v540, %v538
          %v549 = vmul.f32 %v531, %v531
          %v550 = vmul.f32 %v532, %v532
          %v551 = vmul.f32 %v533, %v533
          %v552 = vmul.f32 %v534, %v534
          %v553 = vmul.f32 %v535, %v535
          %v554 = vmul.f32 %v536, %v536
          %v555 = vmul.f32 %v537, %v537
          %v556 = vmul.f32 %v538, %v538
          %vm557 = vcmask 130048
          %v558 = vsel %vm557, %v549, 0.0
          %559 = vadd.xlane.f32.xlu0 %v558
          %v560 = vpop.xlane.xlu0 %559
          %v561 = vsel %vm557, %v550, 0.0
          %562 = vadd.xlane.f32.xlu0 %v561
          %v563 = vpop.xlane.xlu0 %562
          %v564 = vsel %vm557, %v551, 0.0
          %565 = vadd.xlane.f32.xlu0 %v564
          %v566 = vpop.xlane.xlu0 %565
          %v567 = vsel %vm557, %v552, 0.0
          %568 = vadd.xlane.f32.xlu0 %v567
          %v569 = vpop.xlane.xlu0 %568
          %v570 = vsel %vm557, %v553, 0.0
          %571 = vadd.xlane.f32.xlu0 %v570
          %v572 = vpop.xlane.xlu0 %571
          %v573 = vsel %vm557, %v554, 0.0
          %574 = vadd.xlane.f32.xlu0 %v573
          %v575 = vpop.xlane.xlu0 %574
          %v576 = vsel %vm557, %v555, 0.0
          %577 = vadd.xlane.f32.xlu0 %v576
          %v578 = vpop.xlane.xlu0 %577
          %v579 = vsel %vm557, %v556, 0.0
          %580 = vadd.xlane.f32.xlu0 %v579
          %v581 = vpop.xlane.xlu0 %580
          %v582 = vld [vmem:[#allocation3] sm:$0xff]
          %v583 = vld [vmem:[#allocation3 + $0x8] sm:$0xff]
          %v584 = vld [vmem:[#allocation3 + $0x10] sm:$0xff]
          %v585 = vld [vmem:[#allocation3 + $0x18] sm:$0xff]
          %v586 = vld [vmem:[#allocation3 + $0x20] sm:$0xff]
          %v587 = vld [vmem:[#allocation3 + $0x28] sm:$0xff]
          %v588 = vld [vmem:[#allocation3 + $0x30] sm:$0xff]
          %v589 = vld [vmem:[#allocation3 + $0x38] sm:$0xff]
          %v590 = vsub.f32 %v560, %v582
          %v591 = vsub.f32 %v563, %v583
          %v592 = vsub.f32 %v566, %v584
          %v593 = vsub.f32 %v569, %v585
          %v594 = vsub.f32 %v572, %v586
          %v595 = vsub.f32 %v575, %v587
          %v596 = vsub.f32 %v578, %v588
          %v597 = vsub.f32 %v581, %v589
          %v598 = vmul.f32 %v590, 0.5
          %v599 = vmul.f32 %v591, 0.5
          %v600 = vmul.f32 %v592, 0.5
          %v601 = vmul.f32 %v593, 0.5
          %v602 = vmul.f32 %v594, 0.5
          %v603 = vmul.f32 %v595, 0.5
          %v604 = vmul.f32 %v596, 0.5
          %v605 = vmul.f32 %v597, 0.5
          %614 = vrot.lane.b32.xlu0 %v598, 16
          %v615 = vpop.permute.xlu0 %614
          %616 = vrot.lane.b32.xlu0 %v599, 16
          %v617 = vpop.permute.xlu0 %616
          %618 = vrot.lane.b32.xlu0 %v600, 16
          %v619 = vpop.permute.xlu0 %618
          %620 = vrot.lane.b32.xlu0 %v601, 16
          %v621 = vpop.permute.xlu0 %620
          %622 = vrot.lane.b32.xlu0 %v602, 16
          %v623 = vpop.permute.xlu0 %622
          %624 = vrot.lane.b32.xlu0 %v603, 16
          %v625 = vpop.permute.xlu0 %624
          %626 = vrot.lane.b32.xlu0 %v604, 16
          %v627 = vpop.permute.xlu0 %626
          %628 = vrot.lane.b32.xlu0 %v605, 16
          %v629 = vpop.permute.xlu0 %628
          %v638 = vadd.f32 %v541, %v615
          %v639 = vadd.f32 %v542, %v617
          %v640 = vadd.f32 %v543, %v619
          %v641 = vadd.f32 %v544, %v621
          %v642 = vadd.f32 %v545, %v623
          %v643 = vadd.f32 %v546, %v625
          %v644 = vadd.f32 %v547, %v627
          %v645 = vadd.f32 %v548, %v629
          %654 = vrot.lane.b32.xlu0 %v638, 112
          %v655 = vpop.permute.xlu0 %654
          %656 = vrot.lane.b32.xlu0 %v639, 112
          %v657 = vpop.permute.xlu0 %656
          %658 = vrot.lane.b32.xlu0 %v640, 112
          %v659 = vpop.permute.xlu0 %658
          %660 = vrot.lane.b32.xlu0 %v641, 112
          %v661 = vpop.permute.xlu0 %660
          %662 = vrot.lane.b32.xlu0 %v642, 112
          %v663 = vpop.permute.xlu0 %662
          %664 = vrot.lane.b32.xlu0 %v643, 112
          %v665 = vpop.permute.xlu0 %664
          %666 = vrot.lane.b32.xlu0 %v644, 112
          %v667 = vpop.permute.xlu0 %666
          %668 = vrot.lane.b32.xlu0 %v645, 112
          %v669 = vpop.permute.xlu0 %668
          %678 = vst.msk [vmem:[%s323] sm:$0xff] %vm518, %v655
          %679 = vst.msk [vmem:[%s323 + $0x8] sm:$0xff] %vm518, %v657
          %680 = vst.msk [vmem:[%s323 + $0x10] sm:$0xff] %vm518, %v659
          %681 = vst.msk [vmem:[%s323 + $0x18] sm:$0xff] %vm518, %v661
          %682 = vst.msk [vmem:[%s323 + $0x20] sm:$0xff] %vm518, %v663
          %683 = vst.msk [vmem:[%s323 + $0x28] sm:$0xff] %vm518, %v665
          %684 = vst.msk [vmem:[%s323 + $0x30] sm:$0xff] %vm518, %v667
          %685 = vst.msk [vmem:[%s323 + $0x38] sm:$0xff] %vm518, %v669
        $region82: #{tpu_custom_call.1} parent=69 // pred_fallthru
          _
        %s686 = smul.u32 8, %s20
        %p687 = scmp.lt.s32.totalorder %s686, 31
        %s688 = scalar_select %p687, %s686, 31
        %s689 = smul.addr %s688, 8
        %s690 = scalar_lea.vmem %s4, %s689
        // Predicated region
        $region83: #{tpu_custom_call.1} parent=69 // pred_check
          %p691 = pneg %p147
        $region84: #{tpu_custom_call.1} parent=69 // pred_check_branch
          %693 = sbr.rel (%p691) target = $region86
        $region85: #{tpu_custom_call.1} parent=69 // pred_region
          %s694 = smul.u32 8, %s20
        $region86: #{tpu_custom_call.1} parent=69 // pred_fallthru
          _
      $region70: #{tpu_custom_call.1} parent=5 // pred_fallthru
        _
      %p695 = scmp.le.s32.totalorder 2, %s11
      // Predicated region
      $region87: #{tpu_custom_call.1} parent=5 // pred_check
        %p696 = pneg %p695
      $region88: #{tpu_custom_call.1} parent=5 // pred_check_branch
        %698 = sbr.rel (%p696) target = $region90
      $region89: #{tpu_custom_call.1} parent=5 // pred_region
        %s699 = ssub.s32 %s11, 2
        // Predicated region
        $region91: #{tpu_custom_call.1} parent=89 // pred_check
          %p700 = pneg %p153
        $region92: #{tpu_custom_call.1} parent=89 // pred_check_branch
          %702 = sbr.rel (%p700) target = $region94
        $region93: #{tpu_custom_call.1} parent=89 // pred_region
          %s703 = smul.u32 8, %s22
          %p704 = scmp.lt.s32.totalorder %s703, 31
          %s705 = scalar_select %p704, %s703, 31
          %s706 = smul.addr %s705, 8
          %s707 = scalar_lea.vmem %s4, %s706
        $region94: #{tpu_custom_call.1} parent=89 // pred_fallthru
          _
      $region90: #{tpu_custom_call.1} parent=5 // pred_fallthru
        _
    $region6: #{tpu_custom_call.1} parent=1 // loop_footer
      %s15 = sadd.s32 1, %s11
    $region7: #{tpu_custom_call.1} parent=1 // loop_footer_branch
      %10 = sbr.rel target = $region3
    $region8: #{tpu_custom_call.1} parent=1 // loop_exit
      _

</llo_original>
